<compile_context>
chip_gen: v5e
topology: v5e:2x2
jax: 0.10.0
libtpu: 0.0.40
codegen_flags: <defaults>
</compile_context>

<pallas_src>
import jax
import jax.numpy as jnp
from jax.experimental import pallas as pl
from jax.experimental.pallas import tpu as pltpu

C_IN, C_OUT, K = 5, 1000, 8
L_IN = 300                       # smallest length compatible with AvgPool1d(293) -> 1
L_CONV = L_IN - K + 1            # 293
BN_EPS = 1e-5

B_TILE_MAX = 512                 # batch rows per grid step (sublane-dense, VMEM-safe
                                 # on v5e/v6e/v7x default scoped VMEM)


def freq_branch_kernel(mp_ref, w_ref, shift_ref, lin_ref, out_ref):
    # mp_ref:    (B_TILE, 40)   pooled (mean over 293 positions) im2col patches
    # w_ref:     (40, 1000)     conv weight with BN scale folded in
    # shift_ref: (1, 1000)      folded conv-bias + BN shift
    # lin_ref:   (2,) SMEM scalars [linear_w, linear_b]
    # out_ref:   (B_TILE, 1000) final output layout (no channel padding)
    pooled = jnp.dot(mp_ref[...], w_ref[...],
                     preferred_element_type=jnp.float32) + shift_ref[...]
    # TODO(synk): Dropout1d(0.1) layers are identity in eval mode; not applied.
    act = jnp.maximum(pooled, 0.0)                       # ReLU
    out_ref[...] = (act * lin_ref[0] + lin_ref[1]).astype(out_ref.dtype)  # Linear(1,1)


def freq_branch_forward(x, params, *, b_tile_max=B_TILE_MAX, out_dtype=jnp.float32):
    N = x.shape[0]
    xf = x.astype(jnp.float32)

    # --- pooled im2col in ONE pass over x (prefix-sum + window differences) ---
    # mean_patches[:, c*K + k] = mean(x[:, c, k:k+L_CONV], axis=-1)
    cs = jnp.concatenate(
        [jnp.zeros((N, C_IN, 1), jnp.float32), jnp.cumsum(xf, axis=-1)], axis=-1
    )                                                               # (N, 5, 301)
    window_sums = cs[:, :, L_CONV:L_CONV + K] - cs[:, :, :K]        # (N, 5, 8)
    mean_patches = (window_sums * (1.0 / L_CONV)).reshape(N, C_IN * K)  # (N, 40)

    # --- fold conv bias + eval-mode BN into a single affine (W', shift') ---
    inv_std = 1.0 / jnp.sqrt(params["bn_var"] + BN_EPS)             # (1000,)
    scale = params["bn_gamma"] * inv_std                            # (1000,)
    w_fold = (params["conv_w"].reshape(C_OUT, C_IN * K)
              * scale[:, None]).T.astype(jnp.float32)               # (40, 1000)
    shift_fold = (params["conv_b"] * scale
                  + params["bn_beta"] - params["bn_mean"] * scale)  # (1000,)
    shift_fold = shift_fold.reshape(1, C_OUT).astype(jnp.float32)
    lin = jnp.stack([params["lin_w"], params["lin_b"]]).astype(jnp.float32)  # (2,)

    # --- batch tiling: sublane-dense rows, large tiles, >=2 steps at large N ---
    n_pad8 = pl.cdiv(N, 8) * 8
    b_tile = min(b_tile_max, n_pad8)
    n_pad = pl.cdiv(n_pad8, b_tile) * b_tile
    mp_pad = jnp.pad(mean_patches, ((0, n_pad - N), (0, 0)))        # (n_pad, 40)

    grid = (n_pad // b_tile,)
    cost = pl.CostEstimate(
        flops=2 * n_pad * (C_IN * K) * C_OUT,
        transcendentals=0,
        bytes_accessed=4 * (n_pad * C_IN * K + C_IN * K * C_OUT
                            + C_OUT + n_pad * C_OUT))

    out = pl.pallas_call(
        freq_branch_kernel,
        out_shape=jax.ShapeDtypeStruct((n_pad, C_OUT), out_dtype),
        grid=grid,
        in_specs=[
            pl.BlockSpec((b_tile, C_IN * K), lambda b: (b, 0)),
            pl.BlockSpec((C_IN * K, C_OUT), lambda b: (0, 0)),
            pl.BlockSpec((1, C_OUT), lambda b: (0, 0)),
            pl.BlockSpec(memory_space=pltpu.MemorySpace.SMEM),
        ],
        out_specs=pl.BlockSpec((b_tile, C_OUT), lambda b: (b, 0)),
        compiler_params=pltpu.CompilerParams(dimension_semantics=("parallel",)),
        cost_estimate=cost,
    )(mp_pad, w_fold, shift_fold, lin)

    # Only row padding (if any) is stripped; channel axis is already final.
    # (N, 1000) -> (N, 1000, 1) matches the PyTorch output layout.
    return out[:N].reshape(N, C_OUT, 1)


def reference(x, params):
    """Pure-JAX reference (eval-mode semantics) for correctness check."""
    conv = jax.lax.conv_general_dilated(
        x, params["conv_w"], window_strides=(1,), padding="VALID",
        dimension_numbers=("NCH", "OIH", "NCH")) + params["conv_b"][None, :, None]
    inv_std = 1.0 / jnp.sqrt(params["bn_var"] + BN_EPS)
    bn = ((conv - params["bn_mean"][None, :, None]) * inv_std[None, :, None]
          * params["bn_gamma"][None, :, None] + params["bn_beta"][None, :, None])
    pooled = jnp.mean(bn, axis=2, keepdims=True)                    # (N, 1000, 1)
    act = jnp.maximum(pooled, 0.0)
    return act * params["lin_w"] + params["lin_b"]


if __name__ == "__main__":
    key = jax.random.PRNGKey(0)
    ks = jax.random.split(key, 9)
    N = 2
    x = jax.random.normal(ks[0], (N, C_IN, L_IN), jnp.float32)

    params = {
        "conv_w": 0.05 * jax.random.normal(ks[1], (C_OUT, C_IN, K), jnp.float32),
        "conv_b": 0.05 * jax.random.normal(ks[2], (C_OUT,), jnp.float32),
        "bn_gamma": 1.0 + 0.1 * jax.random.normal(ks[3], (C_OUT,), jnp.float32),
        "bn_beta": 0.1 * jax.random.normal(ks[4], (C_OUT,), jnp.float32),
        "bn_mean": 0.1 * jax.random.normal(ks[5], (C_OUT,), jnp.float32),
        "bn_var": jnp.abs(jax.random.normal(ks[6], (C_OUT,), jnp.float32)) + 0.5,
        "lin_w": 0.5 * jax.random.normal(ks[7], (), jnp.float32),
        "lin_b": 0.1 * jax.random.normal(ks[8], (), jnp.float32),
    }

    out = freq_branch_forward(x, params)
    jax.block_until_ready(out)

    ref = reference(x, params)
    assert out.shape == (N, C_OUT, 1)
    assert jnp.allclose(out, ref, atol=1e-4, rtol=1e-4)
    print("KERNEL_OK")
</pallas_src>

<mosaic_0001>
module attributes {stable_mosaic.version = 11 : i64} {
  func.func @freq_branch_kernel(%arg0: i32, %arg1: memref<8x40xf32, #tpu.memory_space<vmem>>, %arg2: memref<40x1000xf32, #tpu.memory_space<vmem>>, %arg3: memref<1x1000xf32, #tpu.memory_space<vmem>>, %arg4: memref<2xf32, #tpu.memory_space<smem>>, %arg5: memref<8x1000xf32, #tpu.memory_space<vmem>>) attributes {dimension_semantics = [#tpu.dimension_semantics<parallel>], iteration_bounds = array<i64: 1>, scalar_prefetch = 0 : i64, scratch_operands = 0 : i64, tpu.core_type = #tpu.core_type<tc>, window_params = [{transform_indices = @transform_0, window_bounds = array<i64: 8, 40>}, {pipeline_mode = #tpu.pipeline_mode<synchronous>, transform_indices = @transform_1, window_bounds = array<i64: 40, 1000>}, {pipeline_mode = #tpu.pipeline_mode<synchronous>, transform_indices = @transform_2, window_bounds = array<i64: 1, 1000>}, {transform_indices = @transform_3, window_bounds = array<i64: 2>}, {transform_indices = @transform_4, window_bounds = array<i64: 8, 1000>}]} {
    %c0 = arith.constant 0 : index
    %c0_0 = arith.constant 0 : index
    %0 = vector.load %arg1[%c0, %c0_0] : memref<8x40xf32, #tpu.memory_space<vmem>>, vector<8x40xf32>
    %c0_1 = arith.constant 0 : index
    %c0_2 = arith.constant 0 : index
    %1 = vector.load %arg2[%c0_1, %c0_2] : memref<40x1000xf32, #tpu.memory_space<vmem>>, vector<40x1000xf32>
    %cst = arith.constant dense<0.000000e+00> : vector<8x1000xf32>
    %2 = tpu.matmul %0, %1, %cst {dimension_numbers = #tpu.dot_dimension_numbers<[1], [0], [0], [1], [0, 0, 1, 1], [], []>} : vector<8x40xf32>, vector<40x1000xf32>, vector<8x1000xf32> -> vector<8x1000xf32>
    %c0_3 = arith.constant 0 : index
    %c0_4 = arith.constant 0 : index
    %3 = vector.load %arg3[%c0_3, %c0_4] : memref<1x1000xf32, #tpu.memory_space<vmem>>, vector<1x1000xf32>
    %4 = vector.broadcast %3 : vector<1x1000xf32> to vector<8x1000xf32>
    %5 = arith.addf %2, %4 : vector<8x1000xf32>
    %cst_5 = arith.constant 0.000000e+00 : f32
    %6 = vector.broadcast %cst_5 : f32 to vector<8x1000xf32>
    %7 = arith.maximumf %5, %6 : vector<8x1000xf32>
    %c0_6 = arith.constant 0 : index
    %8 = memref.load %arg4[%c0_6] : memref<2xf32, #tpu.memory_space<smem>>
    %9 = vector.broadcast %8 : f32 to vector<8x1000xf32>
    %10 = arith.mulf %7, %9 : vector<8x1000xf32>
    %c1 = arith.constant 1 : index
    %11 = memref.load %arg4[%c1] : memref<2xf32, #tpu.memory_space<smem>>
    %12 = vector.broadcast %11 : f32 to vector<8x1000xf32>
    %13 = arith.addf %10, %12 : vector<8x1000xf32>
    %c0_7 = arith.constant 0 : index
    %c0_8 = arith.constant 0 : index
    %14 = vector.load %arg5[%c0_7, %c0_8] : memref<8x1000xf32, #tpu.memory_space<vmem>>, vector<8x1000xf32>
    tpu.vector_store %arg5[%c0_7, %c0_8], %13 {strides = array<i32>} : memref<8x1000xf32, #tpu.memory_space<vmem>>, vector<8x1000xf32>,
    return
  }
  func.func @transform_0(%arg0: i32) -> (i32, i32) {
    %c0_i32 = arith.constant 0 : i32
    %c0_i32_0 = arith.constant 0 : i32
    return %arg0, %c0_i32 : i32, i32
  }
  func.func @transform_1(%arg0: i32) -> (i32, i32) {
    %c0_i32 = arith.constant 0 : i32
    %c0_i32_0 = arith.constant 0 : i32
    %c0_i32_1 = arith.constant 0 : i32
    return %c0_i32, %c0_i32_0 : i32, i32
  }
  func.func @transform_2(%arg0: i32) -> (i32, i32) {
    %c0_i32 = arith.constant 0 : i32
    %c0_i32_0 = arith.constant 0 : i32
    %c0_i32_1 = arith.constant 0 : i32
    return %c0_i32, %c0_i32_0 : i32, i32
  }
  func.func @transform_3(%arg0: i32) -> i32 {
    %c0_i32 = arith.constant 0 : i32
    %c0_i32_0 = arith.constant 0 : i32
    return %c0_i32 : i32
  }
  func.func @transform_4(%arg0: i32) -> (i32, i32) {
    %c0_i32 = arith.constant 0 : i32
    %c0_i32_0 = arith.constant 0 : i32
    return %arg0, %c0_i32 : i32, i32
  }
}

</mosaic_0001>

<llo_original>
// kernel: tpu_custom_call.1
$region0: #{tpu_custom_call.1}
  #allocation0 [shape = 'u32[]', space=smem, size = 0x4, offset = 0x4, fixed_abs, tag = 'smem constant byte address 0x4 - core index']
  #allocation1 [shape = 'u32[72,128]{1,0:T(1,128)}', space=vmem, size = 0x9000, scoped, tag = 'internal scratch']
  %s0 = inlined_call_operand.hbm [shape: f32[8,40], index: 0, kind: input, shape index: {}]
  %s1 = inlined_call_operand.hbm [shape: f32[40,1000], index: 1, kind: input, shape index: {}]
  %s2 = inlined_call_operand.hbm [shape: f32[1,1000], index: 2, kind: input, shape index: {}]
  %s3 = inlined_call_operand.vmem [shape: f32[2], index: 3, kind: input, shape index: {}]
  %s4 = inlined_call_operand.hbm [shape: f32[8,1000], index: 4, kind: output, shape index: {}]
  %s5 = sld [smem:[#allocation0]]
  $region42: #{tpu_custom_call.1} parent=0
    _
  %s7 = ssub.s32 1, %s5
  %s8 = scalar_select 0, %s7, %s5
  $region1: #{tpu_custom_call.1} parent=0
    #allocation2 [shape = 'u8[4096]{0}', space=vmem, size = 0x1000, scoped, tag = 'input window, operand 0, single buffered']
    #allocation3 [shape = 's32[1]{0}', space=sflag, size = 0x4, scoped, tag = 'scoped memory for tpu_custom_call.1']
    #allocation4 [shape = 's32[1]{0}', space=sflag, size = 0x4, scoped, tag = 'scoped memory for tpu_custom_call.1']
    #allocation5 [shape = 's32[1]{0}', space=sflag, size = 0x4, scoped, tag = 'scoped memory for tpu_custom_call.1']
    #allocation6 [shape = 'u8[163840]{0}', space=vmem, size = 0x28000, scoped, tag = 'input window, operand 1, single buffered']
    #allocation7 [shape = 's32[1]{0}', space=sflag, size = 0x4, scoped, tag = 'scoped memory for tpu_custom_call.1']
    #allocation8 [shape = 'u8[4096]{0}', space=vmem, size = 0x1000, scoped, tag = 'input window, operand 2, single buffered']
    #allocation9 [shape = 'u8[512]{0}', space=smem, size = 0x200, scoped, tag = 'input window, operand 3, single buffered']
    #allocation10 [shape = 'u8[32768]{0}', space=vmem, size = 0x8000, scoped, tag = 'output window, operand 0, single buffered']
    %9 = vsyncpa [#allocation3], 0
    %10 = vsyncpa [#allocation7], 0
    %11 = vsyncpa [#allocation5], 0
    %12 = vsyncpa [#allocation4], 0
    // Predicated region
    $region2: #{tpu_custom_call.1} parent=1 // pred_check
      _
    $region3: #{tpu_custom_call.1} parent=1 // pred_check_branch
      %14 = sbr.rel (0) target = $region5
    $region4: #{tpu_custom_call.1} parent=1 // pred_region
      %16 = vsyncadd [#allocation3], 0
      %s18 = sshll.u32 %s0, 4
      %s19 = int_to_ptr.hbm [resolvable:$true] %s18
      %s20 = sshll.u32 [#allocation2], 4
      %s21 = int_to_ptr.vmem [resolvable:$true] %s20
      %23 = dma.hbm_to_vmem [thread:$0]  %s19, 128, %s21, [#allocation3]
    $region5: #{tpu_custom_call.1} parent=1 // pred_fallthru
      _
    // Predicated region
    $region6: #{tpu_custom_call.1} parent=1 // pred_check
      _
    $region7: #{tpu_custom_call.1} parent=1 // pred_check_branch
      %25 = sbr.rel (0) target = $region9
    $region8: #{tpu_custom_call.1} parent=1 // pred_region
      %27 = vsyncadd [#allocation7], 0
      %s28 = sshll.u32 %s1, 4
      %s29 = int_to_ptr.hbm [resolvable:$true] %s28
      %s30 = sshll.u32 [#allocation6], 4
      %s31 = int_to_ptr.vmem [resolvable:$true] %s30
      %36 = dma.hbm_to_vmem [thread:$0]  %s29, 5120, %s31, [#allocation7], 1024, 1024, 64
    $region9: #{tpu_custom_call.1} parent=1 // pred_fallthru
      _
    // Predicated region
    $region10: #{tpu_custom_call.1} parent=1 // pred_check
      _
    $region11: #{tpu_custom_call.1} parent=1 // pred_check_branch
      %38 = sbr.rel (0) target = $region13
    $region12: #{tpu_custom_call.1} parent=1 // pred_region
      %40 = vsyncadd [#allocation7], 0
      %s42 = sshll.u32 %s2, 4
      %s43 = int_to_ptr.hbm [resolvable:$true] %s42
      %s44 = sshll.u32 [#allocation8], 4
      %s45 = int_to_ptr.vmem [resolvable:$true] %s44
      %47 = dma.hbm_to_vmem [thread:$0]  %s43, 128, %s45, [#allocation7]
    $region13: #{tpu_custom_call.1} parent=1 // pred_fallthru
      _
    // Predicated region
    $region14: #{tpu_custom_call.1} parent=1 // pred_check
      _
    $region15: #{tpu_custom_call.1} parent=1 // pred_check_branch
      %49 = sbr.rel (0) target = $region17
    $region16: #{tpu_custom_call.1} parent=1 // pred_region
      %51 = vsyncadd [#allocation5], 0
      %s53 = sshll.u32 %s3, 4
      %s54 = int_to_ptr.vmem [resolvable:$true] %s53
      %56 = dma.vmem_to_smem %s54, 16, [#allocation9], [#allocation5]
    $region17: #{tpu_custom_call.1} parent=1 // pred_fallthru
      _
    // Predicated region
    $region18: #{tpu_custom_call.1} parent=1 // pred_check
      _
    $region19: #{tpu_custom_call.1} parent=1 // pred_check_branch
      %58 = sbr.rel (0) target = $region21
    $region20: #{tpu_custom_call.1} parent=1 // pred_region
      %60 = dma.done [#allocation3], 128
    $region21: #{tpu_custom_call.1} parent=1 // pred_fallthru
      _
    // Predicated region
    $region22: #{tpu_custom_call.1} parent=1 // pred_check
      _
    $region23: #{tpu_custom_call.1} parent=1 // pred_check_branch
      %62 = sbr.rel (0) target = $region25
    $region24: #{tpu_custom_call.1} parent=1 // pred_region
      %64 = dma.done [#allocation7], 5120
    $region25: #{tpu_custom_call.1} parent=1 // pred_fallthru
      _
    // Predicated region
    $region26: #{tpu_custom_call.1} parent=1 // pred_check
      _
    $region27: #{tpu_custom_call.1} parent=1 // pred_check_branch
      %66 = sbr.rel (0) target = $region29
    $region28: #{tpu_custom_call.1} parent=1 // pred_region
      %68 = dma.done [#allocation7], 128
    $region29: #{tpu_custom_call.1} parent=1 // pred_fallthru
      _
    // Predicated region
    $region30: #{tpu_custom_call.1} parent=1 // pred_check
      _
    $region31: #{tpu_custom_call.1} parent=1 // pred_check_branch
      %70 = sbr.rel (0) target = $region33
    $region32: #{tpu_custom_call.1} parent=1 // pred_region
      %72 = dma.done [#allocation5], 16
    $region33: #{tpu_custom_call.1} parent=1 // pred_fallthru
      _
    %73 = sfence
    %v74 = vld [vmem:[#allocation2] sm:$0xff]
    %v75 = vld [vmem:[#allocation6] sm:$0xff]
    %v76 = vld [vmem:[#allocation6 + $0x8] sm:$0xff]
    %v77 = vld [vmem:[#allocation6 + $0x10] sm:$0xff]
    %v78 = vld [vmem:[#allocation6 + $0x18] sm:$0xff]
    %v79 = vld [vmem:[#allocation6 + $0x20] sm:$0xff]
    %v80 = vld [vmem:[#allocation6 + $0x28] sm:$0xff]
    %v81 = vld [vmem:[#allocation6 + $0x30] sm:$0xff]
    %v82 = vld [vmem:[#allocation6 + $0x38] sm:$0xff]
    %v83 = vld [vmem:[#allocation6 + $0x40] sm:$0xff]
    %v84 = vld [vmem:[#allocation6 + $0x48] sm:$0xff]
    %v85 = vld [vmem:[#allocation6 + $0x50] sm:$0xff]
    %v86 = vld [vmem:[#allocation6 + $0x58] sm:$0xff]
    %v87 = vld [vmem:[#allocation6 + $0x60] sm:$0xff]
    %v88 = vld [vmem:[#allocation6 + $0x68] sm:$0xff]
    %v89 = vld [vmem:[#allocation6 + $0x70] sm:$0xff]
    %v90 = vld [vmem:[#allocation6 + $0x78] sm:$0xff]
    %v91 = vld [vmem:[#allocation6 + $0x80] sm:$0xff]
    %v92 = vld [vmem:[#allocation6 + $0x88] sm:$0xff]
    %v93 = vld [vmem:[#allocation6 + $0x90] sm:$0xff]
    %v94 = vld [vmem:[#allocation6 + $0x98] sm:$0xff]
    %v95 = vld [vmem:[#allocation6 + $0xa0] sm:$0xff]
    %v96 = vld [vmem:[#allocation6 + $0xa8] sm:$0xff]
    %v97 = vld [vmem:[#allocation6 + $0xb0] sm:$0xff]
    %v98 = vld [vmem:[#allocation6 + $0xb8] sm:$0xff]
    %v99 = vld [vmem:[#allocation6 + $0xc0] sm:$0xff]
    %v100 = vld [vmem:[#allocation6 + $0xc8] sm:$0xff]
    %v101 = vld [vmem:[#allocation6 + $0xd0] sm:$0xff]
    %v102 = vld [vmem:[#allocation6 + $0xd8] sm:$0xff]
    %v103 = vld [vmem:[#allocation6 + $0xe0] sm:$0xff]
    %v104 = vld [vmem:[#allocation6 + $0xe8] sm:$0xff]
    %v105 = vld [vmem:[#allocation6 + $0xf0] sm:$0xff]
    %v106 = vld [vmem:[#allocation6 + $0xf8] sm:$0xff]
    %v107 = vld [vmem:[#allocation6 + $0x100] sm:$0xff]
    %v108 = vld [vmem:[#allocation6 + $0x108] sm:$0xff]
    %v109 = vld [vmem:[#allocation6 + $0x110] sm:$0xff]
    %v110 = vld [vmem:[#allocation6 + $0x118] sm:$0xff]
    %v111 = vld [vmem:[#allocation6 + $0x120] sm:$0xff]
    %v112 = vld [vmem:[#allocation6 + $0x128] sm:$0xff]
    %v113 = vld [vmem:[#allocation6 + $0x130] sm:$0xff]
    %v114 = vld [vmem:[#allocation6 + $0x138] sm:$0xff]
    %v115 = vld [vmem:[#allocation8] sm:$0xff]
    %v117 = vperm.slane %v115, 0
    %v118 = vperm.slane %v115, 1
    %v119 = vperm.slane %v115, 2
    %v120 = vperm.slane %v115, 3
    %v121 = vperm.slane %v115, 4
    %v122 = vperm.slane %v115, 5
    %v123 = vperm.slane %v115, 6
    %v124 = vperm.slane %v115, 7
    %vm133 = vcmask 326656
    %v135 = vsel %vm133, %v74, 0
    %137 = vmatpush.msra.mxu0 0.0
    %138 = vmatpush.msra.mxu0 0.0
    %139 = vmatpush.msra.mxu0 0.0
    %140 = vmatpush.msra.mxu0 0.0
    %141 = vmatpush.msra.mxu0 0.0
    %142 = vmatpush.msra.mxu0 0.0
    %143 = vmatpush.msra.mxu0 0.0
    %144 = vmatpush.msra.mxu0 0.0
    %145 = vmatpush.msra.mxu0 0.0
    %146 = vmatpush.msra.mxu0 0.0
    %147 = vmatpush.msra.mxu0 0.0
    %148 = vmatpush.msra.mxu0 %v107
    %149 = vmatpush.msra.mxu0 %v99
    %150 = vmatpush.msra.mxu0 %v91
    %151 = vmatpush.msra.mxu0 %v83
    %152 = vmatpush.msra.mxu0 %v75
    %153 = vmatmul.f32.gmra.mxu0 %v135
    %v154 = vpop.f32.mrf.mxu0
    %v155 = vadd.f32 %v117, %v154
    %156 = vdwg.mxu0
    %157 = vmatpush.msra.mxu0 0.0
    %158 = vmatpush.msra.mxu0 0.0
    %159 = vmatpush.msra.mxu0 0.0
    %160 = vmatpush.msra.mxu0 0.0
    %161 = vmatpush.msra.mxu0 0.0
    %162 = vmatpush.msra.mxu0 0.0
    %163 = vmatpush.msra.mxu0 0.0
    %164 = vmatpush.msra.mxu0 0.0
    %165 = vmatpush.msra.mxu0 0.0
    %166 = vmatpush.msra.mxu0 0.0
    %167 = vmatpush.msra.mxu0 0.0
    %168 = vmatpush.msra.mxu0 %v108
    %169 = vmatpush.msra.mxu0 %v100
    %170 = vmatpush.msra.mxu0 %v92
    %171 = vmatpush.msra.mxu0 %v84
    %172 = vmatpush.msra.mxu0 %v76
    %173 = vmatmul.f32.gmra.mxu0 %v135
    %v174 = vpop.f32.mrf.mxu0
    %v175 = vadd.f32 %v118, %v174
    %176 = vdwg.mxu0
    %177 = vmatpush.msra.mxu0 0.0
    %178 = vmatpush.msra.mxu0 0.0
    %179 = vmatpush.msra.mxu0 0.0
    %180 = vmatpush.msra.mxu0 0.0
    %181 = vmatpush.msra.mxu0 0.0
    %182 = vmatpush.msra.mxu0 0.0
    %183 = vmatpush.msra.mxu0 0.0
    %184 = vmatpush.msra.mxu0 0.0
    %185 = vmatpush.msra.mxu0 0.0
    %186 = vmatpush.msra.mxu0 0.0
    %187 = vmatpush.msra.mxu0 0.0
    %188 = vmatpush.msra.mxu0 %v109
    %189 = vmatpush.msra.mxu0 %v101
    %190 = vmatpush.msra.mxu0 %v93
    %191 = vmatpush.msra.mxu0 %v85
    %192 = vmatpush.msra.mxu0 %v77
    %193 = vmatmul.f32.gmra.mxu0 %v135
    %v194 = vpop.f32.mrf.mxu0
    %v195 = vadd.f32 %v119, %v194
    %196 = vdwg.mxu0
    %197 = vmatpush.msra.mxu0 0.0
    %198 = vmatpush.msra.mxu0 0.0
    %199 = vmatpush.msra.mxu0 0.0
    %200 = vmatpush.msra.mxu0 0.0
    %201 = vmatpush.msra.mxu0 0.0
    %202 = vmatpush.msra.mxu0 0.0
    %203 = vmatpush.msra.mxu0 0.0
    %204 = vmatpush.msra.mxu0 0.0
    %205 = vmatpush.msra.mxu0 0.0
    %206 = vmatpush.msra.mxu0 0.0
    %207 = vmatpush.msra.mxu0 0.0
    %208 = vmatpush.msra.mxu0 %v110
    %209 = vmatpush.msra.mxu0 %v102
    %210 = vmatpush.msra.mxu0 %v94
    %211 = vmatpush.msra.mxu0 %v86
    %212 = vmatpush.msra.mxu0 %v78
    %213 = vmatmul.f32.gmra.mxu0 %v135
    %v214 = vpop.f32.mrf.mxu0
    %v215 = vadd.f32 %v120, %v214
    %216 = vdwg.mxu0
    %217 = vmatpush.msra.mxu0 0.0
    %218 = vmatpush.msra.mxu0 0.0
    %219 = vmatpush.msra.mxu0 0.0
    %220 = vmatpush.msra.mxu0 0.0
    %221 = vmatpush.msra.mxu0 0.0
    %222 = vmatpush.msra.mxu0 0.0
    %223 = vmatpush.msra.mxu0 0.0
    %224 = vmatpush.msra.mxu0 0.0
    %225 = vmatpush.msra.mxu0 0.0
    %226 = vmatpush.msra.mxu0 0.0
    %227 = vmatpush.msra.mxu0 0.0
    %228 = vmatpush.msra.mxu0 %v111
    %229 = vmatpush.msra.mxu0 %v103
    %230 = vmatpush.msra.mxu0 %v95
    %231 = vmatpush.msra.mxu0 %v87
    %232 = vmatpush.msra.mxu0 %v79
    %233 = vmatmul.f32.gmra.mxu0 %v135
    %v234 = vpop.f32.mrf.mxu0
    %v235 = vadd.f32 %v121, %v234
    %236 = vdwg.mxu0
    %237 = vmatpush.msra.mxu0 0.0
    %238 = vmatpush.msra.mxu0 0.0
    %239 = vmatpush.msra.mxu0 0.0
    %240 = vmatpush.msra.mxu0 0.0
    %241 = vmatpush.msra.mxu0 0.0
    %242 = vmatpush.msra.mxu0 0.0
    %243 = vmatpush.msra.mxu0 0.0
    %244 = vmatpush.msra.mxu0 0.0
    %245 = vmatpush.msra.mxu0 0.0
    %246 = vmatpush.msra.mxu0 0.0
    %247 = vmatpush.msra.mxu0 0.0
    %248 = vmatpush.msra.mxu0 %v112
    %249 = vmatpush.msra.mxu0 %v104
    %250 = vmatpush.msra.mxu0 %v96
    %251 = vmatpush.msra.mxu0 %v88
    %252 = vmatpush.msra.mxu0 %v80
    %253 = vmatmul.f32.gmra.mxu0 %v135
    %v254 = vpop.f32.mrf.mxu0
    %v255 = vadd.f32 %v122, %v254
    %256 = vdwg.mxu0
    %257 = vmatpush.msra.mxu0 0.0
    %258 = vmatpush.msra.mxu0 0.0
    %259 = vmatpush.msra.mxu0 0.0
    %260 = vmatpush.msra.mxu0 0.0
    %261 = vmatpush.msra.mxu0 0.0
    %262 = vmatpush.msra.mxu0 0.0
    %263 = vmatpush.msra.mxu0 0.0
    %264 = vmatpush.msra.mxu0 0.0
    %265 = vmatpush.msra.mxu0 0.0
    %266 = vmatpush.msra.mxu0 0.0
    %267 = vmatpush.msra.mxu0 0.0
    %268 = vmatpush.msra.mxu0 %v113
    %269 = vmatpush.msra.mxu0 %v105
    %270 = vmatpush.msra.mxu0 %v97
    %271 = vmatpush.msra.mxu0 %v89
    %272 = vmatpush.msra.mxu0 %v81
    %273 = vmatmul.f32.gmra.mxu0 %v135
    %v274 = vpop.f32.mrf.mxu0
    %v275 = vadd.f32 %v123, %v274
    %276 = vdwg.mxu0
    %277 = vmatpush.msra.mxu0 0.0
    %278 = vmatpush.msra.mxu0 0.0
    %279 = vmatpush.msra.mxu0 0.0
    %280 = vmatpush.msra.mxu0 0.0
    %281 = vmatpush.msra.mxu0 0.0
    %282 = vmatpush.msra.mxu0 0.0
    %283 = vmatpush.msra.mxu0 0.0
    %284 = vmatpush.msra.mxu0 0.0
    %285 = vmatpush.msra.mxu0 0.0
    %286 = vmatpush.msra.mxu0 0.0
    %287 = vmatpush.msra.mxu0 0.0
    %288 = vmatpush.msra.mxu0 %v114
    %289 = vmatpush.msra.mxu0 %v106
    %290 = vmatpush.msra.mxu0 %v98
    %291 = vmatpush.msra.mxu0 %v90
    %292 = vmatpush.msra.mxu0 %v82
    %293 = vmatmul.f32.gmra.mxu0 %v135
    %v294 = vpop.f32.mrf.mxu0
    %v295 = vadd.f32 %v124, %v294
    %296 = vdwg.mxu0
    %v297 = vmax.f32 %v155, 0.0
    %v298 = vmax.f32 %v175, 0.0
    %v299 = vmax.f32 %v195, 0.0
    %v300 = vmax.f32 %v215, 0.0
    %v301 = vmax.f32 %v235, 0.0
    %v302 = vmax.f32 %v255, 0.0
    %v303 = vmax.f32 %v275, 0.0
    %v304 = vmax.f32 %v295, 0.0
    %s305 = sld [smem:[#allocation9]]
    %v306 = vstv %s305
    %v307 = vmul.f32 %v297, %v306
    %v308 = vmul.f32 %v298, %v306
    %v309 = vmul.f32 %v299, %v306
    %v310 = vmul.f32 %v300, %v306
    %v311 = vmul.f32 %v301, %v306
    %v312 = vmul.f32 %v302, %v306
    %v313 = vmul.f32 %v303, %v306
    %v314 = vmul.f32 %v304, %v306
    %s315 = sld [smem:[#allocation9 + $0x1]]
    %v316 = vstv %s315
    %v317 = vadd.f32 %v307, %v316
    %v318 = vadd.f32 %v308, %v316
    %v319 = vadd.f32 %v309, %v316
    %v320 = vadd.f32 %v310, %v316
    %v321 = vadd.f32 %v311, %v316
    %v322 = vadd.f32 %v312, %v316
    %v323 = vadd.f32 %v313, %v316
    %v324 = vadd.f32 %v314, %v316
    %325 = vst [vmem:[#allocation10] sm:$0xff] %v317
    %326 = vst [vmem:[#allocation10 + $0x8] sm:$0xff] %v318
    %327 = vst [vmem:[#allocation10 + $0x10] sm:$0xff] %v319
    %328 = vst [vmem:[#allocation10 + $0x18] sm:$0xff] %v320
    %329 = vst [vmem:[#allocation10 + $0x20] sm:$0xff] %v321
    %330 = vst [vmem:[#allocation10 + $0x28] sm:$0xff] %v322
    %331 = vst [vmem:[#allocation10 + $0x30] sm:$0xff] %v323
    %vm332 = vcmask 850944
    %333 = vst.msk [vmem:[#allocation10 + $0x38] sm:$0xff] %vm332, %v324
    // Predicated region
    $region34: #{tpu_custom_call.1} parent=1 // pred_check
      _
    $region35: #{tpu_custom_call.1} parent=1 // pred_check_branch
      %335 = sbr.rel (0) target = $region37
    $region36: #{tpu_custom_call.1} parent=1 // pred_region
      %337 = vsyncadd [#allocation4], 0
      %s339 = sshll.u32 [#allocation10], 4
      %s340 = int_to_ptr.vmem [resolvable:$true] %s339
      %s341 = sshll.u32 %s4, 4
      %s342 = int_to_ptr.hbm [resolvable:$true] %s341
      %344 = dma.vmem_to_hbm [thread:$0]  %s340, 1024, %s342, [#allocation4]
    $region37: #{tpu_custom_call.1} parent=1 // pred_fallthru
      _
    // Predicated region
    $region38: #{tpu_custom_call.1} parent=1 // pred_check
      _
    $region39: #{tpu_custom_call.1} parent=1 // pred_check_branch
      %346 = sbr.rel (0) target = $region41
    $region40: #{tpu_custom_call.1} parent=1 // pred_region
      %348 = dma.done [#allocation4], 1024
    $region41: #{tpu_custom_call.1} parent=1 // pred_fallthru
      _
    %349 = vsyncpa [#allocation3], 1
    %350 = vsyncpa [#allocation7], 1
    %351 = vsyncpa [#allocation4], 1
    %352 = vsyncpa [#allocation5], 1

</llo_original>
